<compile_context>
chip_gen: v6e
topology: v6e:2x2x1
jax: 0.10.0
libtpu: 0.0.40
codegen_flags: <defaults>
</compile_context>

<pallas_src>
import functools

import jax
import jax.numpy as jnp
from jax import lax
from jax.experimental import pallas as pl
from jax.experimental.pallas import tpu as pltpu


def _predictor_kernel(x_ref, w1_ref, b1_ref, w2c_ref, b2_ref, o_ref):
    # x_ref   : [TB, 5]   input tile, native PyTorch layout (batch, features)
    # w1_ref  : [100, 5]  ll.weight (PyTorch layout, used as-is)
    # b1_ref  : [100, 1]  ll.bias as a column (lane-broadcasts over batch)
    # w2c_ref : [100, 1]  out.weight as a column
    # b2_ref  : (1,) SMEM out.bias scalar
    # o_ref   : [1, TB]   output tile (lane-dense stores, no masked vst)

    # Layer 1 on the MXU: contract the shared minor dim (5) of both operands
    # -> h^T = W1 @ x^T with shape [100, TB], batch on the lane axis.
    h = lax.dot_general(
        w1_ref[...], x_ref[...],
        dimension_numbers=(((1,), (1,)), ((), ())),
        preferred_element_type=jnp.float32,
    )
    h = jnp.maximum(h + b1_ref[...], 0.0)                     # [100, TB] (VPU)

    # Layer 2 off the MXU: per-lane multiply by the w2 column (VPU) and a
    # sublane-axis reduction (XLU) -> [1, TB].
    y = jnp.sum(h * w2c_ref[...], axis=0, keepdims=True)
    o_ref[...] = (y + b2_ref[0]).astype(o_ref.dtype)


def predictor_forward(x, w1, b1, w2, b2, *, block_b=8192):
    """Fused MLP forward, equivalent to out(relu(ll(x))).

    x  : [B, 5]    float32
    w1 : [100, 5]  float32   (PyTorch nn.Linear(5, 100).weight layout)
    b1 : [100]     float32
    w2 : [1, 100]  float32   (PyTorch nn.Linear(100, 1).weight layout)
    b2 : [1]       float32
    returns [B, 1] float32
    """
    B = x.shape[0]
    H = w1.shape[0]

    # Lane-aligned batch tile (multiple of 128), capped at block_b, and split
    # into >=2 tiles when possible so both v7x TensorCores get work.
    block_b = max(128, pl.cdiv(block_b, 128) * 128)
    b128 = pl.cdiv(B, 128) * 128
    tb = min(block_b, pl.cdiv(pl.cdiv(b128, 2), 128) * 128)
    tb = max(tb, 128)
    b_pad = pl.cdiv(B, tb) * tb

    # Cheap row-pad only when the batch does not divide the tile (no
    # transpose / lane-relayout of the input is needed anymore).
    if b_pad != B:
        x = jnp.pad(x, ((0, b_pad - B), (0, 0)))

    b1c = b1.reshape(H, 1)
    w2c = w2.reshape(H, 1)      # [1,100] -> column [100,1]
    b2s = b2.reshape(1)

    yt = pl.pallas_call(
        _predictor_kernel,
        out_shape=jax.ShapeDtypeStruct((1, b_pad), jnp.float32),
        grid=(b_pad // tb,),
        in_specs=[
            pl.BlockSpec((tb, 5), lambda i: (i, 0)),            # x tile
            pl.BlockSpec((H, 5), lambda i: (0, 0)),             # W1 (resident)
            pl.BlockSpec((H, 1), lambda i: (0, 0)),             # b1 (resident)
            pl.BlockSpec((H, 1), lambda i: (0, 0)),             # w2 col (res.)
            pl.BlockSpec(memory_space=pltpu.MemorySpace.SMEM),  # b2 scalar
        ],
        out_specs=pl.BlockSpec((1, tb), lambda i: (0, i)),
        compiler_params=pltpu.CompilerParams(
            dimension_semantics=("parallel",)),
    )(x, w1, b1c, w2c, b2s)

    # Match the PyTorch module's [B, 1] output.  (Padded tail columns hold
    # garbage; the [:B] slice is required.)
    return yt[0, :B].reshape(B, 1)


def init_params(key):
    """Parameter init mimicking nn.Linear's uniform(-1/sqrt(fan_in), +)."""
    k1, k2, k3, k4 = jax.random.split(key, 4)
    bound1 = 1.0 / jnp.sqrt(5.0)
    bound2 = 1.0 / jnp.sqrt(100.0)
    w1 = jax.random.uniform(k1, (100, 5), jnp.float32, -bound1, bound1)
    b1 = jax.random.uniform(k2, (100,), jnp.float32, -bound1, bound1)
    w2 = jax.random.uniform(k3, (1, 100), jnp.float32, -bound2, bound2)
    b2 = jax.random.uniform(k4, (1,), jnp.float32, -bound2, bound2)
    return w1, b1, w2, b2


def _reference(x, w1, b1, w2, b2):
    return jnp.maximum(x @ w1.T + b1, 0.0) @ w2.T + b2


if __name__ == "__main__":
    key = jax.random.PRNGKey(0)
    k_x, k_x2, k_p = jax.random.split(key, 3)
    w1, b1, w2, b2 = init_params(k_p)

    fwd = jax.jit(functools.partial(predictor_forward, block_b=8192))

    # Small-batch case (single 128-wide tile, grid=(1,)).
    B = 8
    x = jax.random.normal(k_x, (B, 5), jnp.float32)
    out = jax.block_until_ready(fwd(x, w1, b1, w2, b2))
    ref = _reference(x, w1, b1, w2, b2)
    assert out.shape == (B, 1)
    assert jnp.allclose(out, ref, atol=1e-4, rtol=1e-4)

    # Multi-tile case exercising the batch grid + tail padding (grid=(3,)).
    fwd_small_tile = jax.jit(functools.partial(predictor_forward, block_b=128))
    B2 = 300
    x2 = jax.random.normal(k_x2, (B2, 5), jnp.float32)
    out2 = jax.block_until_ready(fwd_small_tile(x2, w1, b1, w2, b2))
    ref2 = _reference(x2, w1, b1, w2, b2)
    assert out2.shape == (B2, 1)
    assert jnp.allclose(out2, ref2, atol=1e-4, rtol=1e-4)

    print("KERNEL_OK")
</pallas_src>

<mosaic_0001>
module attributes {stable_mosaic.version = 11 : i64} {
  func.func @_predictor_kernel(%arg0: i32, %arg1: memref<128x5xf32, #tpu.memory_space<vmem>>, %arg2: memref<100x5xf32, #tpu.memory_space<vmem>>, %arg3: memref<100x1xf32, #tpu.memory_space<vmem>>, %arg4: memref<100x1xf32, #tpu.memory_space<vmem>>, %arg5: memref<1xf32, #tpu.memory_space<smem>>, %arg6: memref<1x128xf32, #tpu.memory_space<vmem>>) attributes {dimension_semantics = [#tpu.dimension_semantics<parallel>], iteration_bounds = array<i64: 1>, scalar_prefetch = 0 : i64, scratch_operands = 0 : i64, tpu.core_type = #tpu.core_type<tc>, window_params = [{transform_indices = @transform_0, window_bounds = array<i64: 128, 5>}, {pipeline_mode = #tpu.pipeline_mode<synchronous>, transform_indices = @transform_1, window_bounds = array<i64: 100, 5>}, {pipeline_mode = #tpu.pipeline_mode<synchronous>, transform_indices = @transform_2, window_bounds = array<i64: 100, 1>}, {pipeline_mode = #tpu.pipeline_mode<synchronous>, transform_indices = @transform_3, window_bounds = array<i64: 100, 1>}, {transform_indices = @transform_4, window_bounds = array<i64: 1>}, {transform_indices = @transform_5, window_bounds = array<i64: 1, 128>}]} {
    %c0 = arith.constant 0 : index
    %c0_0 = arith.constant 0 : index
    %0 = vector.load %arg2[%c0, %c0_0] : memref<100x5xf32, #tpu.memory_space<vmem>>, vector<100x5xf32>
    %c0_1 = arith.constant 0 : index
    %c0_2 = arith.constant 0 : index
    %1 = vector.load %arg1[%c0_1, %c0_2] : memref<128x5xf32, #tpu.memory_space<vmem>>, vector<128x5xf32>
    %cst = arith.constant dense<0.000000e+00> : vector<100x128xf32>
    %2 = tpu.matmul %0, %1, %cst {dimension_numbers = #tpu.dot_dimension_numbers<[1], [1], [0], [0], [0, 0, 1, 0], [], []>} : vector<100x5xf32>, vector<128x5xf32>, vector<100x128xf32> -> vector<100x128xf32>
    %c0_3 = arith.constant 0 : index
    %c0_4 = arith.constant 0 : index
    %3 = vector.load %arg3[%c0_3, %c0_4] : memref<100x1xf32, #tpu.memory_space<vmem>>, vector<100x1xf32>
    %4 = vector.broadcast %3 : vector<100x1xf32> to vector<100x128xf32>
    %5 = arith.addf %2, %4 : vector<100x128xf32>
    %cst_5 = arith.constant 0.000000e+00 : f32
    %6 = vector.broadcast %cst_5 : f32 to vector<100x128xf32>
    %7 = arith.maximumf %5, %6 : vector<100x128xf32>
    %c0_6 = arith.constant 0 : index
    %c0_7 = arith.constant 0 : index
    %8 = vector.load %arg4[%c0_6, %c0_7] : memref<100x1xf32, #tpu.memory_space<vmem>>, vector<100x1xf32>
    %9 = vector.broadcast %8 : vector<100x1xf32> to vector<100x128xf32>
    %10 = arith.mulf %7, %9 : vector<100x128xf32>
    %cst_8 = arith.constant dense<0.000000e+00> : vector<128xf32>
    %11 = vector.multi_reduction <add>, %10, %cst_8 [0] : vector<100x128xf32> to vector<128xf32>
    %12 = vector.shape_cast %11 : vector<128xf32> to vector<1x128xf32>
    %c0_9 = arith.constant 0 : index
    %13 = memref.load %arg5[%c0_9] : memref<1xf32, #tpu.memory_space<smem>>
    %14 = vector.broadcast %13 : f32 to vector<1x128xf32>
    %15 = arith.addf %12, %14 : vector<1x128xf32>
    %c0_10 = arith.constant 0 : index
    %c0_11 = arith.constant 0 : index
    %16 = vector.load %arg6[%c0_10, %c0_11] : memref<1x128xf32, #tpu.memory_space<vmem>>, vector<1x128xf32>
    tpu.vector_store %arg6[%c0_10, %c0_11], %15 {strides = array<i32>} : memref<1x128xf32, #tpu.memory_space<vmem>>, vector<1x128xf32>,
    return
  }
  func.func @transform_0(%arg0: i32) -> (i32, i32) {
    %c0_i32 = arith.constant 0 : i32
    %c0_i32_0 = arith.constant 0 : i32
    return %arg0, %c0_i32 : i32, i32
  }
  func.func @transform_1(%arg0: i32) -> (i32, i32) {
    %c0_i32 = arith.constant 0 : i32
    %c0_i32_0 = arith.constant 0 : i32
    %c0_i32_1 = arith.constant 0 : i32
    return %c0_i32, %c0_i32_0 : i32, i32
  }
  func.func @transform_2(%arg0: i32) -> (i32, i32) {
    %c0_i32 = arith.constant 0 : i32
    %c0_i32_0 = arith.constant 0 : i32
    %c0_i32_1 = arith.constant 0 : i32
    return %c0_i32, %c0_i32_0 : i32, i32
  }
  func.func @transform_3(%arg0: i32) -> (i32, i32) {
    %c0_i32 = arith.constant 0 : i32
    %c0_i32_0 = arith.constant 0 : i32
    %c0_i32_1 = arith.constant 0 : i32
    return %c0_i32, %c0_i32_0 : i32, i32
  }
  func.func @transform_4(%arg0: i32) -> i32 {
    %c0_i32 = arith.constant 0 : i32
    %c0_i32_0 = arith.constant 0 : i32
    return %c0_i32 : i32
  }
  func.func @transform_5(%arg0: i32) -> (i32, i32) {
    %c0_i32 = arith.constant 0 : i32
    %c0_i32_0 = arith.constant 0 : i32
    return %c0_i32, %arg0 : i32, i32
  }
}

</mosaic_0001>

<llo_original>
// kernel: predictor_forward.1
$region0: #{predictor_forward.1}
  #allocation0 [shape = 'u32[]', space=smem, size = 0x4, offset = 0x4, fixed_abs, tag = 'smem constant byte address 0x4 - core index']
  #allocation1 [shape = 'u32[144,128]{1,0:T(1,128)}', space=vmem, size = 0x12000, scoped, tag = 'internal scratch']
  #allocation2 [shape = 'f32[1]{0:T(128)S(6)}', space=smem, size = 0x200, scoped, tag = 'scoped memory for predictor_forward.1']
  %s0 = inlined_call_operand.vmem [shape: f32[128,5], index: 0, kind: input, shape index: {}]
  %s1 = inlined_call_operand.vmem [shape: f32[100,5], index: 1, kind: input, shape index: {}]
  %s2 = inlined_call_operand.vmem [shape: f32[100,1], index: 2, kind: input, shape index: {}]
  %s3 = inlined_call_operand.vmem [shape: f32[100,1], index: 3, kind: input, shape index: {}]
  %s4 = inlined_call_operand.<no memory space> [shape: f32[1], index: 4, kind: input, shape index: {}]
  %s5 = inlined_call_operand.vmem [shape: f32[1,128], index: 5, kind: output, shape index: {}]
  %s6 = sld [smem:[#allocation0]]
  $region30: #{predictor_forward.1} parent=0
    _
  %s8 = ssub.s32 1, %s6
  %s9 = scalar_select 0, %s8, %s6
  %10 = sst [smem:[#allocation2]] %s4
  // Predicated region
  $region2: #{predictor_forward.1} parent=0 // pred_check
    _
  $region3: #{predictor_forward.1} parent=0 // pred_check_branch
    %12 = sbr.rel (0) target = $region5
  $region4: #{predictor_forward.1} parent=0 // pred_region
    _
  $region5: #{predictor_forward.1} parent=0 // pred_fallthru
    _
  // Predicated region
  $region6: #{predictor_forward.1} parent=0 // pred_check
    _
  $region7: #{predictor_forward.1} parent=0 // pred_check_branch
    %14 = sbr.rel (0) target = $region9
  $region8: #{predictor_forward.1} parent=0 // pred_region
    _
  $region9: #{predictor_forward.1} parent=0 // pred_fallthru
    _
  // Predicated region
  $region10: #{predictor_forward.1} parent=0 // pred_check
    _
  $region11: #{predictor_forward.1} parent=0 // pred_check_branch
    %16 = sbr.rel (0) target = $region13
  $region12: #{predictor_forward.1} parent=0 // pred_region
    _
  $region13: #{predictor_forward.1} parent=0 // pred_fallthru
    _
  // Predicated region
  $region14: #{predictor_forward.1} parent=0 // pred_check
    _
  $region15: #{predictor_forward.1} parent=0 // pred_check_branch
    %18 = sbr.rel (0) target = $region17
  $region16: #{predictor_forward.1} parent=0 // pred_region
    _
  $region17: #{predictor_forward.1} parent=0 // pred_fallthru
    _
  // Predicated region
  $region18: #{predictor_forward.1} parent=0 // pred_check
    _
  $region19: #{predictor_forward.1} parent=0 // pred_check_branch
    %20 = sbr.rel (0) target = $region21
  $region20: #{predictor_forward.1} parent=0 // pred_region
    _
  $region21: #{predictor_forward.1} parent=0 // pred_fallthru
    _
  %v21 = vld [vmem:[%s1] sm:$0xff]
  %v22 = vld [vmem:[%s1 + $0x8] sm:$0xff]
  %v23 = vld [vmem:[%s1 + $0x10] sm:$0xff]
  %v24 = vld [vmem:[%s1 + $0x18] sm:$0xff]
  %v25 = vld [vmem:[%s1 + $0x20] sm:$0xff]
  %v26 = vld [vmem:[%s1 + $0x28] sm:$0xff]
  %v27 = vld [vmem:[%s1 + $0x30] sm:$0xff]
  %v28 = vld [vmem:[%s1 + $0x38] sm:$0xff]
  %v29 = vld [vmem:[%s1 + $0x40] sm:$0xff]
  %v30 = vld [vmem:[%s1 + $0x48] sm:$0xff]
  %v31 = vld [vmem:[%s1 + $0x50] sm:$0xff]
  %v32 = vld [vmem:[%s1 + $0x58] sm:$0xff]
  %v33 = vld [vmem:[%s1 + $0x60] sm:$0xf]
  %v34 = vld [vmem:[%s0] sm:$0xff]
  %v35 = vld [vmem:[%s0 + $0x8] sm:$0xff]
  %v36 = vld [vmem:[%s0 + $0x10] sm:$0xff]
  %v37 = vld [vmem:[%s0 + $0x18] sm:$0xff]
  %v38 = vld [vmem:[%s0 + $0x20] sm:$0xff]
  %v39 = vld [vmem:[%s0 + $0x28] sm:$0xff]
  %v40 = vld [vmem:[%s0 + $0x30] sm:$0xff]
  %v41 = vld [vmem:[%s0 + $0x38] sm:$0xff]
  %v42 = vld [vmem:[%s0 + $0x40] sm:$0xff]
  %v43 = vld [vmem:[%s0 + $0x48] sm:$0xff]
  %v44 = vld [vmem:[%s0 + $0x50] sm:$0xff]
  %v45 = vld [vmem:[%s0 + $0x58] sm:$0xff]
  %v46 = vld [vmem:[%s0 + $0x60] sm:$0xff]
  %v47 = vld [vmem:[%s0 + $0x68] sm:$0xff]
  %v48 = vld [vmem:[%s0 + $0x70] sm:$0xff]
  %v49 = vld [vmem:[%s0 + $0x78] sm:$0xff]
  %v50 = vld [vmem:[%s2] sm:$0xff]
  %v51 = vld [vmem:[%s2 + $0x8] sm:$0xff]
  %v52 = vld [vmem:[%s2 + $0x10] sm:$0xff]
  %v53 = vld [vmem:[%s2 + $0x18] sm:$0xff]
  %v54 = vld [vmem:[%s2 + $0x20] sm:$0xff]
  %v55 = vld [vmem:[%s2 + $0x28] sm:$0xff]
  %v56 = vld [vmem:[%s2 + $0x30] sm:$0xff]
  %v57 = vld [vmem:[%s2 + $0x38] sm:$0xff]
  %v58 = vld [vmem:[%s2 + $0x40] sm:$0xff]
  %v59 = vld [vmem:[%s2 + $0x48] sm:$0xff]
  %v60 = vld [vmem:[%s2 + $0x50] sm:$0xff]
  %v61 = vld [vmem:[%s2 + $0x58] sm:$0xff]
  %v62 = vld [vmem:[%s2 + $0x60] sm:$0xf]
  %64 = vset.pattern.permute.xlu0 0
  %65 = vperm.xlu0 %64, %v50
  %v66 = vpop.permute.xlu0 %65
  %69 = vset.pattern.permute.xlu0 0
  %70 = vperm.xlu0 %69, %v51
  %v71 = vpop.permute.xlu0 %70
  %74 = vset.pattern.permute.xlu0 0
  %75 = vperm.xlu0 %74, %v52
  %v76 = vpop.permute.xlu0 %75
  %79 = vset.pattern.permute.xlu0 0
  %80 = vperm.xlu0 %79, %v53
  %v81 = vpop.permute.xlu0 %80
  %84 = vset.pattern.permute.xlu0 0
  %85 = vperm.xlu0 %84, %v54
  %v86 = vpop.permute.xlu0 %85
  %89 = vset.pattern.permute.xlu0 0
  %90 = vperm.xlu0 %89, %v55
  %v91 = vpop.permute.xlu0 %90
  %94 = vset.pattern.permute.xlu0 0
  %95 = vperm.xlu0 %94, %v56
  %v96 = vpop.permute.xlu0 %95
  %99 = vset.pattern.permute.xlu0 0
  %100 = vperm.xlu0 %99, %v57
  %v101 = vpop.permute.xlu0 %100
  %104 = vset.pattern.permute.xlu0 0
  %105 = vperm.xlu0 %104, %v58
  %v106 = vpop.permute.xlu0 %105
  %109 = vset.pattern.permute.xlu0 0
  %110 = vperm.xlu0 %109, %v59
  %v111 = vpop.permute.xlu0 %110
  %114 = vset.pattern.permute.xlu0 0
  %115 = vperm.xlu0 %114, %v60
  %v116 = vpop.permute.xlu0 %115
  %119 = vset.pattern.permute.xlu0 0
  %120 = vperm.xlu0 %119, %v61
  %v121 = vpop.permute.xlu0 %120
  %124 = vset.pattern.permute.xlu0 0
  %125 = vperm.xlu0 %124, %v62
  %v126 = vpop.permute.xlu0 %125
  %vm128 = vcmask 39936
  %v130 = vsel %vm128, %v21, 0
  %v133 = vsel %vm128, %v22, 0
  %v136 = vsel %vm128, %v23, 0
  %v139 = vsel %vm128, %v24, 0
  %v142 = vsel %vm128, %v25, 0
  %v145 = vsel %vm128, %v26, 0
  %v148 = vsel %vm128, %v27, 0
  %v151 = vsel %vm128, %v28, 0
  %v154 = vsel %vm128, %v29, 0
  %v157 = vsel %vm128, %v30, 0
  %v160 = vsel %vm128, %v31, 0
  %v163 = vsel %vm128, %v32, 0
  %v166 = vsel %vm128, %v33, 0
  %v169 = vsel %vm128, %v34, 0
  %v172 = vsel %vm128, %v35, 0
  %v175 = vsel %vm128, %v36, 0
  %v178 = vsel %vm128, %v37, 0
  %v181 = vsel %vm128, %v38, 0
  %v184 = vsel %vm128, %v39, 0
  %v187 = vsel %vm128, %v40, 0
  %v190 = vsel %vm128, %v41, 0
  %v193 = vsel %vm128, %v42, 0
  %v196 = vsel %vm128, %v43, 0
  %v199 = vsel %vm128, %v44, 0
  %v202 = vsel %vm128, %v45, 0
  %v205 = vsel %vm128, %v46, 0
  %v208 = vsel %vm128, %v47, 0
  %v211 = vsel %vm128, %v48, 0
  %v214 = vsel %vm128, %v49, 0
  %216 = vmatprep.subr.mxu0 0.0
  %217 = vmatpush1.xpose.msra.mxu0 %v214
  %218 = vmatprep.subr.mxu0 0.0
  %219 = vmatpush1.xpose.msra.mxu0 %v211
  %220 = vmatprep.subr.mxu0 0.0
  %221 = vmatpush1.xpose.msra.mxu0 %v208
  %222 = vmatprep.subr.mxu0 0.0
  %223 = vmatpush1.xpose.msra.mxu0 %v205
  %224 = vmatprep.subr.mxu0 0.0
  %225 = vmatpush1.xpose.msra.mxu0 %v202
  %226 = vmatprep.subr.mxu0 0.0
  %227 = vmatpush1.xpose.msra.mxu0 %v199
  %228 = vmatprep.subr.mxu0 0.0
  %229 = vmatpush1.xpose.msra.mxu0 %v196
  %230 = vmatprep.subr.mxu0 0.0
  %231 = vmatpush1.xpose.msra.mxu0 %v193
  %232 = vmatprep.subr.mxu0 0.0
  %233 = vmatpush1.xpose.msra.mxu0 %v190
  %234 = vmatprep.subr.mxu0 0.0
  %235 = vmatpush1.xpose.msra.mxu0 %v187
  %236 = vmatprep.subr.mxu0 0.0
  %237 = vmatpush1.xpose.msra.mxu0 %v184
  %238 = vmatprep.subr.mxu0 0.0
  %239 = vmatpush1.xpose.msra.mxu0 %v181
  %240 = vmatprep.subr.mxu0 0.0
  %241 = vmatpush1.xpose.msra.mxu0 %v178
  %242 = vmatprep.subr.mxu0 0.0
  %243 = vmatpush1.xpose.msra.mxu0 %v175
  %244 = vmatprep.subr.mxu0 0.0
  %245 = vmatpush1.xpose.msra.mxu0 %v172
  %246 = vmatprep.subr.mxu0 0.0
  %247 = vmatpush1.xpose.msra.mxu0 %v169
  %248 = vmatprep.subr.mxu0 0.0
  %249 = vmatpush2.xpose.msra.mxu0 0.0
  %250 = vmatprep.subr.mxu0 0.0
  %251 = vmatpush2.xpose.msra.mxu0 0.0
  %252 = vmatprep.subr.mxu0 0.0
  %253 = vmatpush2.xpose.msra.mxu0 0.0
  %254 = vmatprep.subr.mxu0 0.0
  %255 = vmatpush2.xpose.msra.mxu0 0.0
  %256 = vmatprep.subr.mxu0 0.0
  %257 = vmatpush2.xpose.msra.mxu0 0.0
  %258 = vmatprep.subr.mxu0 0.0
  %259 = vmatpush2.xpose.msra.mxu0 0.0
  %260 = vmatprep.subr.mxu0 0.0
  %261 = vmatpush2.xpose.msra.mxu0 0.0
  %262 = vmatprep.subr.mxu0 0.0
  %263 = vmatpush2.xpose.msra.mxu0 0.0
  %264 = vmatprep.subr.mxu0 0.0
  %265 = vmatpush2.xpose.msra.mxu0 0.0
  %266 = vmatprep.subr.mxu0 0.0
  %267 = vmatpush2.xpose.msra.mxu0 0.0
  %268 = vmatprep.subr.mxu0 0.0
  %269 = vmatpush2.xpose.msra.mxu0 0.0
  %270 = vmatprep.subr.mxu0 0.0
  %271 = vmatpush2.xpose.msra.mxu0 0.0
  %272 = vmatprep.subr.mxu0 0.0
  %273 = vmatpush2.xpose.msra.mxu0 0.0
  %274 = vmatprep.subr.mxu0 0.0
  %275 = vmatpush2.xpose.msra.mxu0 0.0
  %276 = vmatprep.subr.mxu0 0.0
  %277 = vmatpush2.xpose.msra.mxu0 0.0
  %278 = vmatprep.subr.mxu0 0.0
  %279 = vmatpush2.xpose.msra.mxu0 0.0
  %280 = vmatprep.mubr.f32.mxu0 0.0
  %281 = vmatmul.mubr.f32.gmra.mxu0 %v130
  %v282 = vpop.f32.mrf.mxu0
  %v283 = vadd.f32 %v66, %v282
  %v284 = vpop.f32.mrf.mxu0
  %285 = vmatprep.mubr.f32.mxu0 0.0
  %286 = vmatmul.mubr.f32.gmra.mxu0 %v133
  %v287 = vpop.f32.mrf.mxu0
  %v288 = vadd.f32 %v71, %v287
  %v289 = vpop.f32.mrf.mxu0
  %290 = vmatprep.mubr.f32.mxu0 0.0
  %291 = vmatmul.mubr.f32.gmra.mxu0 %v136
  %v292 = vpop.f32.mrf.mxu0
  %v293 = vadd.f32 %v76, %v292
  %v294 = vpop.f32.mrf.mxu0
  %295 = vmatprep.mubr.f32.mxu0 0.0
  %296 = vmatmul.mubr.f32.gmra.mxu0 %v139
  %v297 = vpop.f32.mrf.mxu0
  %v298 = vadd.f32 %v81, %v297
  %v299 = vpop.f32.mrf.mxu0
  %300 = vmatprep.mubr.f32.mxu0 0.0
  %301 = vmatmul.mubr.f32.gmra.mxu0 %v142
  %v302 = vpop.f32.mrf.mxu0
  %v303 = vadd.f32 %v86, %v302
  %v304 = vpop.f32.mrf.mxu0
  %305 = vmatprep.mubr.f32.mxu0 0.0
  %306 = vmatmul.mubr.f32.gmra.mxu0 %v145
  %v307 = vpop.f32.mrf.mxu0
  %v308 = vadd.f32 %v91, %v307
  %v309 = vpop.f32.mrf.mxu0
  %310 = vmatprep.mubr.f32.mxu0 0.0
  %311 = vmatmul.mubr.f32.gmra.mxu0 %v148
  %v312 = vpop.f32.mrf.mxu0
  %v313 = vadd.f32 %v96, %v312
  %v314 = vpop.f32.mrf.mxu0
  %315 = vmatprep.mubr.f32.mxu0 0.0
  %316 = vmatmul.mubr.f32.gmra.mxu0 %v151
  %v317 = vpop.f32.mrf.mxu0
  %v318 = vadd.f32 %v101, %v317
  %v319 = vpop.f32.mrf.mxu0
  %320 = vmatprep.mubr.f32.mxu0 0.0
  %321 = vmatmul.mubr.f32.gmra.mxu0 %v154
  %v322 = vpop.f32.mrf.mxu0
  %v323 = vadd.f32 %v106, %v322
  %v324 = vpop.f32.mrf.mxu0
  %325 = vmatprep.mubr.f32.mxu0 0.0
  %326 = vmatmul.mubr.f32.gmra.mxu0 %v157
  %v327 = vpop.f32.mrf.mxu0
  %v328 = vadd.f32 %v111, %v327
  %v329 = vpop.f32.mrf.mxu0
  %330 = vmatprep.mubr.f32.mxu0 0.0
  %331 = vmatmul.mubr.f32.gmra.mxu0 %v160
  %v332 = vpop.f32.mrf.mxu0
  %v333 = vadd.f32 %v116, %v332
  %v334 = vpop.f32.mrf.mxu0
  %335 = vmatprep.mubr.f32.mxu0 0.0
  %336 = vmatmul.mubr.f32.gmra.mxu0 %v163
  %v337 = vpop.f32.mrf.mxu0
  %v338 = vadd.f32 %v121, %v337
  %v339 = vpop.f32.mrf.mxu0
  %340 = vmatprep.mubr.f32.mxu0 0.0
  %341 = vmatmul.mubr.f32.gmra.mxu0 %v166
  %v342 = vpop.f32.mrf.mxu0
  %v343 = vadd.f32 %v126, %v342
  %v344 = vpop.f32.mrf.mxu0
  %345 = vdwg.mxu0
  %v346 = vmax.f32 %v283, 0.0
  %v347 = vmax.f32 %v288, 0.0
  %v348 = vmax.f32 %v293, 0.0
  %v349 = vmax.f32 %v298, 0.0
  %v350 = vmax.f32 %v303, 0.0
  %v351 = vmax.f32 %v308, 0.0
  %v352 = vmax.f32 %v313, 0.0
  %v353 = vmax.f32 %v318, 0.0
  %v354 = vmax.f32 %v323, 0.0
  %v355 = vmax.f32 %v328, 0.0
  %v356 = vmax.f32 %v333, 0.0
  %v357 = vmax.f32 %v338, 0.0
  %v358 = vmax.f32 %v343, 0.0
  %v359 = vld [vmem:[%s3] sm:$0xff]
  %v360 = vld [vmem:[%s3 + $0x8] sm:$0xff]
  %v361 = vld [vmem:[%s3 + $0x10] sm:$0xff]
  %v362 = vld [vmem:[%s3 + $0x18] sm:$0xff]
  %v363 = vld [vmem:[%s3 + $0x20] sm:$0xff]
  %v364 = vld [vmem:[%s3 + $0x28] sm:$0xff]
  %v365 = vld [vmem:[%s3 + $0x30] sm:$0xff]
  %v366 = vld [vmem:[%s3 + $0x38] sm:$0xff]
  %v367 = vld [vmem:[%s3 + $0x40] sm:$0xff]
  %v368 = vld [vmem:[%s3 + $0x48] sm:$0xff]
  %v369 = vld [vmem:[%s3 + $0x50] sm:$0xff]
  %v370 = vld [vmem:[%s3 + $0x58] sm:$0xff]
  %v371 = vld [vmem:[%s3 + $0x60] sm:$0xf]
  %373 = vset.pattern.permute.xlu0 0
  %374 = vperm.xlu0 %373, %v359
  %v375 = vpop.permute.xlu0 %374
  %378 = vset.pattern.permute.xlu0 0
  %379 = vperm.xlu0 %378, %v360
  %v380 = vpop.permute.xlu0 %379
  %383 = vset.pattern.permute.xlu0 0
  %384 = vperm.xlu0 %383, %v361
  %v385 = vpop.permute.xlu0 %384
  %388 = vset.pattern.permute.xlu0 0
  %389 = vperm.xlu0 %388, %v362
  %v390 = vpop.permute.xlu0 %389
  %393 = vset.pattern.permute.xlu0 0
  %394 = vperm.xlu0 %393, %v363
  %v395 = vpop.permute.xlu0 %394
  %398 = vset.pattern.permute.xlu0 0
  %399 = vperm.xlu0 %398, %v364
  %v400 = vpop.permute.xlu0 %399
  %403 = vset.pattern.permute.xlu0 0
  %404 = vperm.xlu0 %403, %v365
  %v405 = vpop.permute.xlu0 %404
  %408 = vset.pattern.permute.xlu0 0
  %409 = vperm.xlu0 %408, %v366
  %v410 = vpop.permute.xlu0 %409
  %413 = vset.pattern.permute.xlu0 0
  %414 = vperm.xlu0 %413, %v367
  %v415 = vpop.permute.xlu0 %414
  %418 = vset.pattern.permute.xlu0 0
  %419 = vperm.xlu0 %418, %v368
  %v420 = vpop.permute.xlu0 %419
  %423 = vset.pattern.permute.xlu0 0
  %424 = vperm.xlu0 %423, %v369
  %v425 = vpop.permute.xlu0 %424
  %428 = vset.pattern.permute.xlu0 0
  %429 = vperm.xlu0 %428, %v370
  %v430 = vpop.permute.xlu0 %429
  %433 = vset.pattern.permute.xlu0 0
  %434 = vperm.xlu0 %433, %v371
  %v435 = vpop.permute.xlu0 %434
  %v437 = vmul.f32 %v346, %v375
  %v438 = vmul.f32 %v347, %v380
  %v439 = vmul.f32 %v348, %v385
  %v440 = vmul.f32 %v349, %v390
  %v441 = vmul.f32 %v350, %v395
  %v442 = vmul.f32 %v351, %v400
  %v443 = vmul.f32 %v352, %v405
  %v444 = vmul.f32 %v353, %v410
  %v445 = vmul.f32 %v354, %v415
  %v446 = vmul.f32 %v355, %v420
  %v447 = vmul.f32 %v356, %v425
  %v448 = vmul.f32 %v357, %v430
  %v449 = vmul.f32 %v358, %v435
  %v450 = vadd.f32 %v437, %v438
  %v451 = vadd.f32 %v450, %v439
  %v452 = vadd.f32 %v451, %v440
  %v453 = vadd.f32 %v452, %v441
  %v454 = vadd.f32 %v453, %v442
  %v455 = vadd.f32 %v454, %v443
  %v456 = vadd.f32 %v455, %v444
  %v457 = vadd.f32 %v456, %v445
  %v458 = vadd.f32 %v457, %v446
  %v459 = vadd.f32 %v458, %v447
  %v460 = vadd.f32 %v459, %v448
  %vm461 = vcmask 1043456
  %v462 = vsel %vm461, %v449, 0.0
  %v463 = vadd.f32 %v460, %v462
  %v464 = vrot.slane %v463, 4
  %v465 = vadd.f32 %v463, %v464
  %v466 = vrot.slane %v465, 2
  %v467 = vadd.f32 %v465, %v466
  %v468 = vrot.slane %v467, 1
  %v469 = vadd.f32 %v467, %v468
  %s470 = sld [smem:[#allocation2]]
  %v471 = vstv %s470
  %v472 = vadd.f32 %v469, %v471
  %473 = vst [vmem:[%s5] sm:$0x1] %v472
  // Predicated region
  $region22: #{predictor_forward.1} parent=0 // pred_check
    _
  $region23: #{predictor_forward.1} parent=0 // pred_check_branch
    %475 = sbr.rel (0) target = $region25
  $region24: #{predictor_forward.1} parent=0 // pred_region
    _
  $region25: #{predictor_forward.1} parent=0 // pred_fallthru
    _
  // Predicated region
  $region26: #{predictor_forward.1} parent=0 // pred_check
    _
  $region27: #{predictor_forward.1} parent=0 // pred_check_branch
    %477 = sbr.rel (0) target = $region29
  $region28: #{predictor_forward.1} parent=0 // pred_region
    _
  $region29: #{predictor_forward.1} parent=0 // pred_fallthru
    _

</llo_original>
